<compile_context>
chip_gen: v5e
topology: v5e:2x2
jax: 0.10.0
libtpu: 0.0.40
codegen_flags: <defaults>
</compile_context>

<pallas_src>
import math

import jax
import jax.numpy as jnp
from jax.experimental import pallas as pl
from jax.experimental.pallas import tpu as pltpu


def _round_up(x: int, m: int) -> int:
    return ((x + m - 1) // m) * m


def mlp_kernel(x_ref, w1_ref, b1_ref, w2_ref, b2_ref, o_ref, acc_ref):
    # x_ref:   (tm, C)  compute dtype (bf16 by default)
    # w1_ref:  (C, th)  compute dtype
    # b1_ref:  (1, th)  f32
    # w2_ref:  (th, C)  compute dtype
    # b2_ref:  (1, C)   f32
    # o_ref:   (tm, C)  output dtype (f32)
    # acc_ref: (tm, C)  f32 accumulator, resident across the H (reduction) axis
    h_idx = pl.program_id(1)

    @pl.when(h_idx == 0)
    def _init():
        # Seed the accumulator with the c_proj bias: folds the bias add into
        # the init and removes one full VPU pass over (tm, C) per tile.
        acc_ref[...] = jnp.broadcast_to(
            b2_ref[...].astype(jnp.float32), acc_ref.shape
        )

    # c_fc partial: (tm, th) slice of the hidden activations, f32 accumulate.
    h = jnp.dot(x_ref[...], w1_ref[...], preferred_element_type=jnp.float32)
    h = h + b1_ref[...]

    # Exact GELU (matches torch.nn.GELU() default, erf-based), kept in f32.
    inv_sqrt2 = jnp.float32(1.0 / math.sqrt(2.0))
    h = jnp.float32(0.5) * h * (jnp.float32(1.0) + jax.lax.erf(h * inv_sqrt2))

    # Partial c_proj: accumulate this hidden slice's contribution on the MXU.
    acc_ref[...] += jnp.dot(
        h.astype(w2_ref.dtype), w2_ref[...], preferred_element_type=jnp.float32
    )

    @pl.when(h_idx == pl.num_programs(1) - 1)
    def _writeback():
        o_ref[...] = acc_ref[...].astype(o_ref.dtype)


def mlp_forward(x, w1, b1, w2, b2, *, tm=256, th=512,
                compute_dtype=jnp.bfloat16):
    """x: (B, T, C) -> (B, T, C).  w1: (C, 4C), b1: (4C,), w2: (4C, C), b2: (C,)."""
    B, T, C = x.shape
    H = w1.shape[1]  # 4 * C
    M = B * T

    # Effective tile sizes: production defaults, shrink gracefully for tiny
    # shapes (tm must stay a multiple of 8 sublanes; th must divide H).
    tm_eff = tm if M >= tm else _round_up(M, 8)
    m_pad = _round_up(M, tm_eff)
    th_eff = th if (th <= H and H % th == 0) else H

    x2d = x.reshape(M, C).astype(compute_dtype)
    if m_pad != M:
        x2d = jnp.pad(x2d, ((0, m_pad - M), (0, 0)))

    w1c = w1.astype(compute_dtype)
    w2c = w2.astype(compute_dtype)
    b1_2d = b1.reshape(1, H).astype(jnp.float32)
    b2_2d = b2.reshape(1, C).astype(jnp.float32)

    grid = (m_pad // tm_eff, H // th_eff)

    out2d = pl.pallas_call(
        mlp_kernel,
        out_shape=jax.ShapeDtypeStruct((m_pad, C), x.dtype),
        grid_spec=pltpu.PrefetchScalarGridSpec(
            num_scalar_prefetch=0,
            grid=grid,  # M (parallel) first, H (reduction) last
            in_specs=[
                pl.BlockSpec((tm_eff, C), lambda i, h: (i, 0)),   # x rows
                pl.BlockSpec((C, th_eff), lambda i, h: (0, h)),   # W1 slice
                pl.BlockSpec((1, th_eff), lambda i, h: (0, h)),   # b1 slice
                pl.BlockSpec((th_eff, C), lambda i, h: (h, 0)),   # W2 slice
                pl.BlockSpec((1, C), lambda i, h: (0, 0)),        # b2 (const)
            ],
            out_specs=pl.BlockSpec((tm_eff, C), lambda i, h: (i, 0)),
            scratch_shapes=[pltpu.VMEM((tm_eff, C), jnp.float32)],  # f32 acc
        ),
        compiler_params=pltpu.CompilerParams(
            dimension_semantics=("parallel", "arbitrary"),
            # Double-buffered bf16 weight slices + x/o tiles + f32 accumulator
            # stay a few MiB at GPT-2 sizes; budgeted well under v7x's 64 MiB.
            vmem_limit_bytes=48 * 1024 * 1024,
        ),
    )(x2d, w1c, b1_2d, w2c, b2_2d)

    if m_pad != M:
        out2d = out2d[:M]
    return out2d.reshape(B, T, C)


def mlp_reference(x, w1, b1, w2, b2):
    h = jnp.dot(x, w1) + b1
    h = 0.5 * h * (1.0 + jax.lax.erf(h / jnp.sqrt(2.0)))
    return jnp.dot(h, w2) + b2


if __name__ == "__main__":
    # Small config consistent with the module: n_embd=32, batch=2, seq=8.
    B, T, C = 2, 8, 32
    H = 4 * C

    key = jax.random.PRNGKey(0)
    kx, kw1, kb1, kw2, kb2 = jax.random.split(key, 5)

    x = jax.random.normal(kx, (B, T, C), dtype=jnp.float32)

    # Deterministic parameter init (torch nn.Linear-style uniform bounds).
    bound1 = 1.0 / math.sqrt(C)
    w1 = jax.random.uniform(kw1, (C, H), jnp.float32, -bound1, bound1)
    b1 = jax.random.uniform(kb1, (H,), jnp.float32, -bound1, bound1)
    bound2 = 1.0 / math.sqrt(H)
    w2 = jax.random.uniform(kw2, (H, C), jnp.float32, -bound2, bound2)
    b2 = jax.random.uniform(kb2, (C,), jnp.float32, -bound2, bound2)

    ref = mlp_reference(x, w1, b1, w2, b2)

    # Exact-precision path (f32 compute) -> tight tolerance vs reference.
    out_f32 = jax.block_until_ready(
        mlp_forward(x, w1, b1, w2, b2, compute_dtype=jnp.float32)
    )
    assert out_f32.shape == (B, T, C)
    assert jnp.allclose(out_f32, ref, atol=1e-5, rtol=1e-5), "f32 mismatch"

    # Default MXU-friendly bf16 path -> looser tolerance (expected trade-off).
    out_bf16 = jax.block_until_ready(mlp_forward(x, w1, b1, w2, b2))
    assert out_bf16.shape == (B, T, C)
    assert jnp.allclose(out_bf16, ref, atol=5e-2, rtol=5e-2), "bf16 mismatch"

    print("KERNEL_OK")
</pallas_src>

<mosaic_0001>
module attributes {stable_mosaic.version = 11 : i64} {
  func.func @mlp_kernel(%arg0: i32, %arg1: i32, %arg2: memref<16x32xf32, #tpu.memory_space<vmem>>, %arg3: memref<32x128xf32, #tpu.memory_space<vmem>>, %arg4: memref<1x128xf32, #tpu.memory_space<vmem>>, %arg5: memref<128x32xf32, #tpu.memory_space<vmem>>, %arg6: memref<1x32xf32, #tpu.memory_space<vmem>>, %arg7: memref<16x32xf32, #tpu.memory_space<vmem>>, %arg8: memref<16x32xf32, #tpu.memory_space<vmem>>) attributes {dimension_semantics = [#tpu.dimension_semantics<parallel>, #tpu.dimension_semantics<arbitrary>], iteration_bounds = array<i64: 1, 1>, scalar_prefetch = 0 : i64, scratch_operands = 1 : i64, tpu.core_type = #tpu.core_type<tc>, window_params = [{transform_indices = @transform_0, window_bounds = array<i64: 16, 32>}, {transform_indices = @transform_1, window_bounds = array<i64: 32, 128>}, {transform_indices = @transform_2, window_bounds = array<i64: 1, 128>}, {transform_indices = @transform_3, window_bounds = array<i64: 128, 32>}, {pipeline_mode = #tpu.pipeline_mode<synchronous>, transform_indices = @transform_4, window_bounds = array<i64: 1, 32>}, {transform_indices = @transform_5, window_bounds = array<i64: 16, 32>}]} {
    %c0_i32 = arith.constant 0 : i32
    %0 = arith.cmpi eq, %arg1, %c0_i32 : i32
    %1 = arith.extui %0 : i1 to i32
    %c0_i32_0 = arith.constant 0 : i32
    %2 = arith.cmpi ne, %1, %c0_i32_0 : i32
    scf.if %2 {
      %c0_18 = arith.constant 0 : index
      %c0_19 = arith.constant 0 : index
      %25 = vector.load %arg6[%c0_18, %c0_19] : memref<1x32xf32, #tpu.memory_space<vmem>>, vector<1x32xf32>
      %26 = vector.shape_cast %25 : vector<1x32xf32> to vector<1x32xf32>
      %27 = vector.broadcast %26 : vector<1x32xf32> to vector<16x32xf32>
      %c0_20 = arith.constant 0 : index
      %c0_21 = arith.constant 0 : index
      %28 = vector.load %arg8[%c0_20, %c0_21] : memref<16x32xf32, #tpu.memory_space<vmem>>, vector<16x32xf32>
      tpu.vector_store %arg8[%c0_20, %c0_21], %27 {strides = array<i32>} : memref<16x32xf32, #tpu.memory_space<vmem>>, vector<16x32xf32>,
    } else {
    }
    %c0 = arith.constant 0 : index
    %c0_1 = arith.constant 0 : index
    %3 = vector.load %arg2[%c0, %c0_1] : memref<16x32xf32, #tpu.memory_space<vmem>>, vector<16x32xf32>
    %c0_2 = arith.constant 0 : index
    %c0_3 = arith.constant 0 : index
    %4 = vector.load %arg3[%c0_2, %c0_3] : memref<32x128xf32, #tpu.memory_space<vmem>>, vector<32x128xf32>
    %cst = arith.constant dense<0.000000e+00> : vector<16x128xf32>
    %5 = tpu.matmul %3, %4, %cst {dimension_numbers = #tpu.dot_dimension_numbers<[1], [0], [0], [1], [0, 0, 1, 1], [], []>} : vector<16x32xf32>, vector<32x128xf32>, vector<16x128xf32> -> vector<16x128xf32>
    %c0_4 = arith.constant 0 : index
    %c0_5 = arith.constant 0 : index
    %6 = vector.load %arg4[%c0_4, %c0_5] : memref<1x128xf32, #tpu.memory_space<vmem>>, vector<1x128xf32>
    %7 = vector.broadcast %6 : vector<1x128xf32> to vector<16x128xf32>
    %8 = arith.addf %5, %7 : vector<16x128xf32>
    %cst_6 = arith.constant 5.000000e-01 : f32
    %9 = vector.broadcast %cst_6 : f32 to vector<16x128xf32>
    %10 = arith.mulf %9, %8 : vector<16x128xf32>
    %cst_7 = arith.constant 0.707106769 : f32
    %11 = vector.broadcast %cst_7 : f32 to vector<16x128xf32>
    %12 = arith.mulf %8, %11 : vector<16x128xf32>
    %13 = math.erf %12 : vector<16x128xf32>
    %cst_8 = arith.constant 1.000000e+00 : f32
    %14 = vector.broadcast %cst_8 : f32 to vector<16x128xf32>
    %15 = arith.addf %14, %13 : vector<16x128xf32>
    %16 = arith.mulf %10, %15 : vector<16x128xf32>
    %c0_9 = arith.constant 0 : index
    %c0_10 = arith.constant 0 : index
    %17 = vector.load %arg8[%c0_9, %c0_10] : memref<16x32xf32, #tpu.memory_space<vmem>>, vector<16x32xf32>
    %c0_11 = arith.constant 0 : index
    %c0_12 = arith.constant 0 : index
    %18 = vector.load %arg5[%c0_11, %c0_12] : memref<128x32xf32, #tpu.memory_space<vmem>>, vector<128x32xf32>
    %cst_13 = arith.constant dense<0.000000e+00> : vector<16x32xf32>
    %19 = tpu.matmul %16, %18, %cst_13 {dimension_numbers = #tpu.dot_dimension_numbers<[1], [0], [0], [1], [0, 0, 1, 1], [], []>} : vector<16x128xf32>, vector<128x32xf32>, vector<16x32xf32> -> vector<16x32xf32>
    %20 = arith.addf %17, %19 : vector<16x32xf32>
    %c0_14 = arith.constant 0 : index
    %c0_15 = arith.constant 0 : index
    %21 = vector.load %arg8[%c0_14, %c0_15] : memref<16x32xf32, #tpu.memory_space<vmem>>, vector<16x32xf32>
    tpu.vector_store %arg8[%c0_14, %c0_15], %20 {strides = array<i32>} : memref<16x32xf32, #tpu.memory_space<vmem>>, vector<16x32xf32>,
    %c0_i32_16 = arith.constant 0 : i32
    %22 = arith.cmpi eq, %arg1, %c0_i32_16 : i32
    %23 = arith.extui %22 : i1 to i32
    %c0_i32_17 = arith.constant 0 : i32
    %24 = arith.cmpi ne, %23, %c0_i32_17 : i32
    scf.if %24 {
      %c0_18 = arith.constant 0 : index
      %c0_19 = arith.constant 0 : index
      %25 = vector.load %arg8[%c0_18, %c0_19] : memref<16x32xf32, #tpu.memory_space<vmem>>, vector<16x32xf32>
      %c0_20 = arith.constant 0 : index
      %c0_21 = arith.constant 0 : index
      %26 = vector.load %arg7[%c0_20, %c0_21] : memref<16x32xf32, #tpu.memory_space<vmem>>, vector<16x32xf32>
      tpu.vector_store %arg7[%c0_20, %c0_21], %25 {strides = array<i32>} : memref<16x32xf32, #tpu.memory_space<vmem>>, vector<16x32xf32>,
    } else {
    }
    return
  }
  func.func @transform_0(%arg0: i32, %arg1: i32) -> (i32, i32) {
    %c0_i32 = arith.constant 0 : i32
    %c0_i32_0 = arith.constant 0 : i32
    return %arg0, %c0_i32 : i32, i32
  }
  func.func @transform_1(%arg0: i32, %arg1: i32) -> (i32, i32) {
    %c0_i32 = arith.constant 0 : i32
    %c0_i32_0 = arith.constant 0 : i32
    return %c0_i32, %arg1 : i32, i32
  }
  func.func @transform_2(%arg0: i32, %arg1: i32) -> (i32, i32) {
    %c0_i32 = arith.constant 0 : i32
    %c0_i32_0 = arith.constant 0 : i32
    return %c0_i32, %arg1 : i32, i32
  }
  func.func @transform_3(%arg0: i32, %arg1: i32) -> (i32, i32) {
    %c0_i32 = arith.constant 0 : i32
    %c0_i32_0 = arith.constant 0 : i32
    return %arg1, %c0_i32 : i32, i32
  }
  func.func @transform_4(%arg0: i32, %arg1: i32) -> (i32, i32) {
    %c0_i32 = arith.constant 0 : i32
    %c0_i32_0 = arith.constant 0 : i32
    %c0_i32_1 = arith.constant 0 : i32
    return %c0_i32, %c0_i32_0 : i32, i32
  }
  func.func @transform_5(%arg0: i32, %arg1: i32) -> (i32, i32) {
    %c0_i32 = arith.constant 0 : i32
    %c0_i32_0 = arith.constant 0 : i32
    return %arg0, %c0_i32 : i32, i32
  }
}

</mosaic_0001>

<llo_original>
// kernel: tpu_custom_call.1
$region0: #{tpu_custom_call.1}
  #allocation0 [shape = 'u32[]', space=smem, size = 0x4, offset = 0x4, fixed_abs, tag = 'smem constant byte address 0x4 - core index']
  #allocation1 [shape = 'u32[72,128]{1,0:T(1,128)}', space=vmem, size = 0x9000, scoped, tag = 'internal scratch']
  #allocation2 [shape = 'f32[16,32]{1,0:T(8,128)}', space=vmem, size = 0x2000, scoped, tag = 'scratch operand']
  %s0 = inlined_call_operand.vmem [shape: f32[16,32], index: 0, kind: input, shape index: {}]
  %s1 = inlined_call_operand.vmem [shape: f32[32,128], index: 1, kind: input, shape index: {}]
  %s2 = inlined_call_operand.vmem [shape: f32[1,128], index: 2, kind: input, shape index: {}]
  %s3 = inlined_call_operand.vmem [shape: f32[128,32], index: 3, kind: input, shape index: {}]
  %s4 = inlined_call_operand.vmem [shape: f32[1,32], index: 4, kind: input, shape index: {}]
  %s5 = inlined_call_operand.hbm [shape: f32[16,32], index: 5, kind: output, shape index: {}]
  %s6 = sld [smem:[#allocation0]]
  $region38: #{tpu_custom_call.1} parent=0
    _
  %s8 = ssub.s32 1, %s6
  %s9 = scalar_select 0, %s8, %s6
  $region1: #{tpu_custom_call.1} parent=0
    #allocation3 [shape = 'u8[8192]{0}', space=vmem, size = 0x2000, scoped, tag = 'output window, operand 0, single buffered']
    #allocation4 [shape = 's32[1]{0}', space=sflag, size = 0x4, scoped, tag = 'scoped memory for tpu_custom_call.1']
    %10 = vsyncpa [#allocation4], 0
    // Predicated region
    $region2: #{tpu_custom_call.1} parent=1 // pred_check
      _
    $region3: #{tpu_custom_call.1} parent=1 // pred_check_branch
      %12 = sbr.rel (0) target = $region5
    $region4: #{tpu_custom_call.1} parent=1 // pred_region
      _
    $region5: #{tpu_custom_call.1} parent=1 // pred_fallthru
      _
    // Predicated region
    $region6: #{tpu_custom_call.1} parent=1 // pred_check
      _
    $region7: #{tpu_custom_call.1} parent=1 // pred_check_branch
      %14 = sbr.rel (0) target = $region9
    $region8: #{tpu_custom_call.1} parent=1 // pred_region
      _
    $region9: #{tpu_custom_call.1} parent=1 // pred_fallthru
      _
    // Predicated region
    $region10: #{tpu_custom_call.1} parent=1 // pred_check
      _
    $region11: #{tpu_custom_call.1} parent=1 // pred_check_branch
      %16 = sbr.rel (0) target = $region13
    $region12: #{tpu_custom_call.1} parent=1 // pred_region
      _
    $region13: #{tpu_custom_call.1} parent=1 // pred_fallthru
      _
    // Predicated region
    $region14: #{tpu_custom_call.1} parent=1 // pred_check
      _
    $region15: #{tpu_custom_call.1} parent=1 // pred_check_branch
      %18 = sbr.rel (0) target = $region17
    $region16: #{tpu_custom_call.1} parent=1 // pred_region
      _
    $region17: #{tpu_custom_call.1} parent=1 // pred_fallthru
      _
    // Predicated region
    $region18: #{tpu_custom_call.1} parent=1 // pred_check
      _
    $region19: #{tpu_custom_call.1} parent=1 // pred_check_branch
      %20 = sbr.rel (0) target = $region21
    $region20: #{tpu_custom_call.1} parent=1 // pred_region
      _
    $region21: #{tpu_custom_call.1} parent=1 // pred_fallthru
      _
    %p21 = scmp.eq.s32.totalorder 0, 0
    // Predicated region
    $region22: #{tpu_custom_call.1} parent=1 // pred_check
      %p22 = pneg %p21
    $region23: #{tpu_custom_call.1} parent=1 // pred_check_branch
      %24 = sbr.rel (%p22) target = $region25
    $region24: #{tpu_custom_call.1} parent=1 // pred_region
      %v25 = vld [vmem:[%s4] sm:$0x1]
      %v27 = vperm.slane %v25, 0
      %vm29 = vcmask 261120
      %30 = vst.msk [vmem:[#allocation2] sm:$0xff] %vm29, %v27
      %31 = vst.msk [vmem:[#allocation2 + $0x8] sm:$0xff] %vm29, %v27
    $region25: #{tpu_custom_call.1} parent=1 // pred_fallthru
      _
    %v32 = vld [vmem:[%s0] sm:$0xff]
    %v33 = vld [vmem:[%s0 + $0x8] sm:$0xff]
    %v34 = vld [vmem:[%s1] sm:$0xff]
    %v35 = vld [vmem:[%s1 + $0x8] sm:$0xff]
    %v36 = vld [vmem:[%s1 + $0x10] sm:$0xff]
    %v37 = vld [vmem:[%s1 + $0x18] sm:$0xff]
    %v38 = vld [vmem:[%s2] sm:$0x1]
    %v40 = vperm.slane %v38, 0
    %vm42 = vcmask 261120
    %v44 = vsel %vm42, %v32, 0
    %v47 = vsel %vm42, %v33, 0
    %49 = vmatpush.msra.mxu0 0.0
    %50 = vmatpush.msra.mxu0 0.0
    %51 = vmatpush.msra.mxu0 0.0
    %52 = vmatpush.msra.mxu0 0.0
    %53 = vmatpush.msra.mxu0 0.0
    %54 = vmatpush.msra.mxu0 0.0
    %55 = vmatpush.msra.mxu0 0.0
    %56 = vmatpush.msra.mxu0 0.0
    %57 = vmatpush.msra.mxu0 0.0
    %58 = vmatpush.msra.mxu0 0.0
    %59 = vmatpush.msra.mxu0 0.0
    %60 = vmatpush.msra.mxu0 0.0
    %61 = vmatpush.msra.mxu0 %v37
    %62 = vmatpush.msra.mxu0 %v36
    %63 = vmatpush.msra.mxu0 %v35
    %64 = vmatpush.msra.mxu0 %v34
    %65 = vmatmul.f32.gmra.mxu0 %v44
    %v66 = vpop.f32.mrf.mxu0
    %v67 = vadd.f32 %v40, %v66
    %68 = vmatmul.f32.gmra.mxu0 %v47
    %v69 = vpop.f32.mrf.mxu0
    %v70 = vadd.f32 %v40, %v69
    %71 = vdwg.mxu0
    %v72 = vmul.f32 %v67, 0.5
    %v73 = vmul.f32 %v70, 0.5
    %v74 = vmul.f32 %v67, 0.70710677
    %v75 = vmul.f32 %v70, 0.70710677
    %v76 = vmul.f32 %v74, %v74
    %v77 = vmin.f32 16.0, %v76
    %v78 = vmul.f32 %v77, 2.1237322e-06
    %v79 = vadd.f32 %v78, 0.00028619796
    %v80 = vmul.f32 %v77, %v79
    %v81 = vadd.f32 %v80, 0.0036580483
    %v82 = vmul.f32 %v77, %v81
    %v83 = vadd.f32 %v82, 0.05243302
    %v84 = vmul.f32 %v77, %v83
    %v85 = vadd.f32 %v84, 0.18741608
    %v86 = vmul.f32 %v77, %v85
    %v87 = vadd.f32 %v86, 1.1283791
    %v88 = vmul.f32 %v74, %v87
    %v89 = vmul.f32 %v77, 3.8918573e-05
    %v90 = vadd.f32 %v89, 0.001143296
    %v91 = vmul.f32 %v77, %v90
    %v92 = vadd.f32 %v91, 0.014752088
    %v93 = vmul.f32 %v77, %v92
    %v94 = vadd.f32 %v93, 0.112945676
    %v95 = vmul.f32 %v77, %v94
    %v96 = vadd.f32 %v95, 0.4994258
    %v97 = vmul.f32 %v77, %v96
    %v98 = vadd.f32 %v97, 1.0
    %v99 = vrcp.pop %v98
    %v100 = vmul.f32 %v98, %v99
    %v101 = vsub.f32 1.0, %v100
    %v102 = vmul.f32 %v99, %v101
    %v103 = vadd.f32 %v99, %v102
    %vm104 = vweird.f32 %v98
    %vm105 = vweird.f32 %v99
    %vm106 = vmor %vm104, %vm105
    %v107 = vsel %vm106, %v99, %v103
    %v108 = vand.u32 2147483647, %v98
    %vm109 = vcmp.eq.f32.partialorder %v108, 8.507059e+37
    %v110 = vand.u32 %v98, 2147483648
    %v111 = vor.u32 1.1754944e-38, %v110
    %v112 = vsel %vm109, %v111, %v107
    %v113 = vmul.f32 %v88, %v112
    %v114 = vmin.f32 %v113, 1.0
    %v115 = vmax.f32 %v114, -1.0
    %v116 = vmul.f32 %v75, %v75
    %v117 = vmin.f32 16.0, %v116
    %v118 = vmul.f32 %v117, 2.1237322e-06
    %v119 = vadd.f32 %v118, 0.00028619796
    %v120 = vmul.f32 %v117, %v119
    %v121 = vadd.f32 %v120, 0.0036580483
    %v122 = vmul.f32 %v117, %v121
    %v123 = vadd.f32 %v122, 0.05243302
    %v124 = vmul.f32 %v117, %v123
    %v125 = vadd.f32 %v124, 0.18741608
    %v126 = vmul.f32 %v117, %v125
    %v127 = vadd.f32 %v126, 1.1283791
    %v128 = vmul.f32 %v75, %v127
    %v129 = vmul.f32 %v117, 3.8918573e-05
    %v130 = vadd.f32 %v129, 0.001143296
    %v131 = vmul.f32 %v117, %v130
    %v132 = vadd.f32 %v131, 0.014752088
    %v133 = vmul.f32 %v117, %v132
    %v134 = vadd.f32 %v133, 0.112945676
    %v135 = vmul.f32 %v117, %v134
    %v136 = vadd.f32 %v135, 0.4994258
    %v137 = vmul.f32 %v117, %v136
    %v138 = vadd.f32 %v137, 1.0
    %v139 = vrcp.pop %v138
    %v140 = vmul.f32 %v138, %v139
    %v141 = vsub.f32 1.0, %v140
    %v142 = vmul.f32 %v139, %v141
    %v143 = vadd.f32 %v139, %v142
    %vm144 = vweird.f32 %v138
    %vm145 = vweird.f32 %v139
    %vm146 = vmor %vm144, %vm145
    %v147 = vsel %vm146, %v139, %v143
    %v148 = vand.u32 2147483647, %v138
    %vm149 = vcmp.eq.f32.partialorder %v148, 8.507059e+37
    %v150 = vand.u32 %v138, 2147483648
    %v151 = vor.u32 1.1754944e-38, %v150
    %v152 = vsel %vm149, %v151, %v147
    %v153 = vmul.f32 %v128, %v152
    %v154 = vmin.f32 %v153, 1.0
    %v155 = vmax.f32 %v154, -1.0
    %v156 = vadd.f32 %v115, 1.0
    %v157 = vadd.f32 %v155, 1.0
    %v158 = vmul.f32 %v72, %v156
    %v159 = vmul.f32 %v73, %v157
    %v160 = vld [vmem:[#allocation2] sm:$0xff]
    %v161 = vld [vmem:[#allocation2 + $0x8] sm:$0xff]
    %v162 = vld [vmem:[%s3] sm:$0xff]
    %v163 = vld [vmem:[%s3 + $0x8] sm:$0xff]
    %v164 = vld [vmem:[%s3 + $0x10] sm:$0xff]
    %v165 = vld [vmem:[%s3 + $0x18] sm:$0xff]
    %v166 = vld [vmem:[%s3 + $0x20] sm:$0xff]
    %v167 = vld [vmem:[%s3 + $0x28] sm:$0xff]
    %v168 = vld [vmem:[%s3 + $0x30] sm:$0xff]
    %v169 = vld [vmem:[%s3 + $0x38] sm:$0xff]
    %v170 = vld [vmem:[%s3 + $0x40] sm:$0xff]
    %v171 = vld [vmem:[%s3 + $0x48] sm:$0xff]
    %v172 = vld [vmem:[%s3 + $0x50] sm:$0xff]
    %v173 = vld [vmem:[%s3 + $0x58] sm:$0xff]
    %v174 = vld [vmem:[%s3 + $0x60] sm:$0xff]
    %v175 = vld [vmem:[%s3 + $0x68] sm:$0xff]
    %v176 = vld [vmem:[%s3 + $0x70] sm:$0xff]
    %v177 = vld [vmem:[%s3 + $0x78] sm:$0xff]
    %178 = vmatpush.msra.mxu0 %v177
    %179 = vmatpush.msra.mxu0 %v176
    %180 = vmatpush.msra.mxu0 %v175
    %181 = vmatpush.msra.mxu0 %v174
    %182 = vmatpush.msra.mxu0 %v173
    %183 = vmatpush.msra.mxu0 %v172
    %184 = vmatpush.msra.mxu0 %v171
    %185 = vmatpush.msra.mxu0 %v170
    %186 = vmatpush.msra.mxu0 %v169
    %187 = vmatpush.msra.mxu0 %v168
    %188 = vmatpush.msra.mxu0 %v167
    %189 = vmatpush.msra.mxu0 %v166
    %190 = vmatpush.msra.mxu0 %v165
    %191 = vmatpush.msra.mxu0 %v164
    %192 = vmatpush.msra.mxu0 %v163
    %193 = vmatpush.msra.mxu0 %v162
    %194 = vmatmul.f32.gmra.mxu0 %v158
    %v195 = vpop.f32.mrf.mxu0
    %v196 = vadd.f32 0.0, %v195
    %197 = vmatmul.f32.gmra.mxu0 %v159
    %v198 = vpop.f32.mrf.mxu0
    %v199 = vadd.f32 0.0, %v198
    %200 = vdwg.mxu0
    %v201 = vadd.f32 %v160, %v196
    %v202 = vadd.f32 %v161, %v199
    %203 = vst.msk [vmem:[#allocation2] sm:$0xff] %vm42, %v201
    %204 = vst.msk [vmem:[#allocation2 + $0x8] sm:$0xff] %vm42, %v202
    // Predicated region
    $region26: #{tpu_custom_call.1} parent=1 // pred_check
      %p205 = pneg %p21
    $region27: #{tpu_custom_call.1} parent=1 // pred_check_branch
      %207 = sbr.rel (%p205) target = $region29
    $region28: #{tpu_custom_call.1} parent=1 // pred_region
      %v208 = vld [vmem:[#allocation2] sm:$0xff]
      %v209 = vld [vmem:[#allocation2 + $0x8] sm:$0xff]
      %210 = vst.msk [vmem:[#allocation3] sm:$0xff] %vm42, %v208
      %211 = vst.msk [vmem:[#allocation3 + $0x8] sm:$0xff] %vm42, %v209
    $region29: #{tpu_custom_call.1} parent=1 // pred_fallthru
      _
    // Predicated region
    $region30: #{tpu_custom_call.1} parent=1 // pred_check
      _
    $region31: #{tpu_custom_call.1} parent=1 // pred_check_branch
      %213 = sbr.rel (0) target = $region33
    $region32: #{tpu_custom_call.1} parent=1 // pred_region
      %215 = vsyncadd [#allocation4], 0
      %s216 = sshll.u32 [#allocation3], 4
      %s217 = int_to_ptr.vmem [resolvable:$true] %s216
      %s218 = sshll.u32 %s5, 4
      %s219 = int_to_ptr.hbm [resolvable:$true] %s218
      %224 = dma.vmem_to_hbm [thread:$0]  %s217, 256, %s219, [#allocation4], 128, 128, 8
    $region33: #{tpu_custom_call.1} parent=1 // pred_fallthru
      _
    // Predicated region
    $region34: #{tpu_custom_call.1} parent=1 // pred_check
      _
    $region35: #{tpu_custom_call.1} parent=1 // pred_check_branch
      %226 = sbr.rel (0) target = $region37
    $region36: #{tpu_custom_call.1} parent=1 // pred_region
      %228 = dma.done [#allocation4], 256
    $region37: #{tpu_custom_call.1} parent=1 // pred_fallthru
      _
    %229 = vsyncpa [#allocation4], 1

</llo_original>
